<compile_context>
chip_gen: v7x
topology: tpu7x:2x2x1
jax: 0.10.0
libtpu: 0.0.40
codegen_flags: <defaults>
</compile_context>

<pallas_src>
import functools

import jax
import jax.numpy as jnp
import numpy as np
from jax.experimental import pallas as pl
from jax.experimental.pallas import tpu as pltpu


# ---------------------------------------------------------------------------
# Fixed connectivity matrices from the reference module.
# ---------------------------------------------------------------------------
H0_DATA = [
    [0.3, 0.9, 0.0, 0.0, 0.0, 0.0, 0.0, 0.0, 0.0, 0.7],
    [0.9, 0.4, 1.0, 0.0, 0.0, 0.0, 0.0, 0.0, 0.0, 0.0],
    [0.0, 0.8, 0.3, 0.8, 0.0, 0.0, 0.0, 0.0, 0.0, 0.0],
    [0.0, 0.0, 0.7, 0.5, 0.9, 0.0, 0.0, 0.0, 0.0, 0.0],
    [0.0, 0.0, 0.0, 0.8, 0.3, 0.3, 0.0, 0.0, 0.0, 0.0],
    [0.0, 0.0, 0.0, 0.0, 0.7, 0.3, 0.9, 0.0, 0.0, 0.0],
    [0.0, 0.0, 0.0, 0.0, 0.0, 0.7, 0.4, 0.9, 0.0, 0.0],
    [0.0, 0.0, 0.0, 0.0, 0.0, 0.0, 0.5, 0.5, 0.7, 0.0],
    [0.0, 0.0, 0.0, 0.0, 0.0, 0.0, 0.0, 0.9, 0.3, 0.9],
    [0.7, 0.0, 0.0, 0.0, 0.0, 0.0, 0.0, 0.0, 0.8, 0.3],
]

W0_DATA = [
    [0.3, 0.7, 0.0, 0.0, 0.0, 0.0, 0.0, 0.0, 0.5, 0.3],
    [0.3, 0.2, 0.5, 0.0, 0.0, 0.0, 0.0, 0.0, 0.0, 0.7],
    [0.0, 0.1, 0.3, 0.5, 0.0, 0.0, 0.0, 0.0, 0.0, 0.0],
    [0.0, 0.5, 0.2, 0.2, 0.5, 0.0, 0.0, 0.0, 0.0, 0.0],
    [0.5, 0.0, 0.0, 0.5, 0.1, 0.9, 0.0, 0.0, 0.0, 0.0],
    [0.0, 0.0, 0.0, 0.0, 0.3, 0.3, 0.5, 0.4, 0.0, 0.0],
    [0.0, 0.0, 0.0, 0.6, 0.0, 0.2, 0.3, 0.5, 0.0, 0.0],
    [0.0, 0.0, 0.0, 0.0, 0.0, 0.0, 0.5, 0.3, 0.5, 0.0],
    [0.0, 0.0, 0.0, 0.0, 0.0, 0.2, 0.0, 0.2, 0.3, 0.7],
    [0.7, 0.0, 0.0, 0.0, 0.0, 0.0, 0.0, 0.2, 0.3, 0.5],
]

DATA = [
    [0.002, 0.001, 0.001, 0.0, 0.00152, 0.00152, 0.0001, 0.0, 0.003, 0.0003],
    [370, 570, 770, 970, 1170, 1300, 1506, 1700, 1962, 2100],
]


# ---------------------------------------------------------------------------
# Pallas kernel: one membrane-potential update, cell type baked in at trace
# time via the (Python constant) coupling sign.
# ---------------------------------------------------------------------------
def _make_mp_kernel(sign):
    two_sign = 2.0 * float(sign)   # -2.0 for Mitral, +2.0 for Granule
    leak = 1.0 - 2.0 / 7.0         # (1 - 2/tau) with tau = 7

    def kernel(p_ref, wt_ref, v_ref, i_ref, out_ref):
        # p_ref  : VMEM f32[1, N]  lane-dense membrane potential (aliased out)
        # wt_ref : VMEM f32[N, N]  transposed connectivity (W^T / H0^T)
        # v_ref  : VMEM f32[N, 1]  activity of the other cell layer (column)
        # i_ref  : VMEM f32[1, N]  external drive (receptor / centrifugal), row
        p = p_ref[...]
        wt = wt_ref[...]
        v = v_ref[...]
        inp = i_ref[...]

        # (W @ v)^T as a lane-dense row, exact f32 on VPU + sublane reduce:
        #   (v * W^T)[j, i] = v[j] * W[i, j]  -> sum over j gives (W @ v)[i]
        wv = jnp.sum(v * wt, axis=0, keepdims=True)          # (1, N)

        # Mitral : p - 2*(H0@v + p/7 - I) == leak*p - 2*wv + 2*I
        # Granule: p + 2*(W0@v - p/7 + I) == leak*p + 2*wv + 2*I
        out_ref[...] = leak * p + two_sign * wv + 2.0 * inp

    return kernel


@functools.partial(jax.jit, static_argnames=("sign",), donate_argnames=("p_row",))
def membrane_potential_step(p_row, w_t, v_col, i_row, *, sign):
    """One forward step. p_row/i_row are (1, N) rows, v_col is (N, 1), w_t is W^T."""
    n = p_row.shape[1]
    return pl.pallas_call(
        _make_mp_kernel(sign),
        out_shape=jax.ShapeDtypeStruct((1, n), jnp.float32),
        in_specs=[
            pl.BlockSpec(memory_space=pltpu.MemorySpace.VMEM),   # potential (aliased)
            pl.BlockSpec(memory_space=pltpu.MemorySpace.VMEM),   # W^T
            pl.BlockSpec(memory_space=pltpu.MemorySpace.VMEM),   # other-layer activity
            pl.BlockSpec(memory_space=pltpu.MemorySpace.VMEM),   # external drive
        ],
        out_specs=pl.BlockSpec(memory_space=pltpu.MemorySpace.VMEM),
        input_output_aliases={0: 0},   # in-place state update
    )(p_row, w_t, v_col, i_row)


# ---------------------------------------------------------------------------
# Thin stateful wrapper mirroring the PyTorch nn.Module.
# ---------------------------------------------------------------------------
class MembranePotentialJAX:
    def __init__(self, cell_type, cell_count):
        self.celltype = cell_type
        self.cell_count = cell_count
        # Lane-dense (1, N) row state; torch init is ones(N, 1) * 0.3.
        self.potential = jnp.ones((1, cell_count), dtype=jnp.float32) * 0.3
        if cell_type == "Mitral":
            self.H0 = jnp.asarray(H0_DATA, dtype=jnp.float32)
            self._w_t = self.H0.T
            self._sign = -1.0
        elif cell_type == "Granule":
            self.W0 = jnp.asarray(W0_DATA, dtype=jnp.float32)
            self._w_t = self.W0.T
            self._sign = 1.0
        else:
            raise ValueError(f"unknown cell_type {cell_type!r}")

    def forward(self, inputs):
        # inputs[0]: external drive  (cell_count, 1) column (PyTorch layout)
        # inputs[1]: other-layer activity (cell_count, 1) column
        n = self.cell_count
        i_row = jnp.asarray(inputs[0], dtype=jnp.float32).reshape(1, n)
        v_col = jnp.asarray(inputs[1], dtype=jnp.float32).reshape(n, 1)
        self.potential = membrane_potential_step(
            self.potential, self._w_t, v_col, i_row, sign=self._sign
        )
        # Return in the PyTorch (cell_count, 1) column-vector layout.
        return self.potential.reshape(n, 1)


# ---------------------------------------------------------------------------
# Pure-numpy (float64) reference for correctness checking.
# ---------------------------------------------------------------------------
def ref_forward(p_col, W, v_col, i_col, celltype):
    if celltype == "Mitral":
        return p_col - 2.0 * (W @ v_col + p_col / 7.0 - i_col)
    return p_col + 2.0 * (W @ v_col - p_col / 7.0 + i_col)


if __name__ == "__main__":
    cell_count = 10

    key = jax.random.PRNGKey(0)
    k1, k2 = jax.random.split(key)

    # Mitral inputs: receptor drive (odor pattern) + granule activity V_y.
    odor = jnp.asarray(DATA[0], dtype=jnp.float32).reshape(cell_count, 1)
    v_y = 0.1 * jax.random.uniform(k1, (cell_count, 1), dtype=jnp.float32)

    # Granule inputs: constant centrifugal drive I_c = 0.1 + mitral activity V_x.
    i_c = jnp.full((cell_count, 1), 0.1, dtype=jnp.float32)
    v_x = 0.1 * jax.random.uniform(k2, (cell_count, 1), dtype=jnp.float32)

    mitral = MembranePotentialJAX("Mitral", cell_count)
    granule = MembranePotentialJAX("Granule", cell_count)

    # Two recurrent steps per layer to exercise the in-place state update.
    out_m = mitral.forward([odor, v_y])
    out_m = mitral.forward([odor, v_y])
    out_g = granule.forward([i_c, v_x])
    out_g = granule.forward([i_c, v_x])
    out_m, out_g = jax.block_until_ready((out_m, out_g))

    # float64 reference.
    H0_np = np.asarray(H0_DATA, dtype=np.float64)
    W0_np = np.asarray(W0_DATA, dtype=np.float64)
    odor_np = np.asarray(odor, dtype=np.float64)
    vy_np = np.asarray(v_y, dtype=np.float64)
    ic_np = np.asarray(i_c, dtype=np.float64)
    vx_np = np.asarray(v_x, dtype=np.float64)

    p_m = np.ones((cell_count, 1), dtype=np.float64) * 0.3
    p_g = np.ones((cell_count, 1), dtype=np.float64) * 0.3
    for _ in range(2):
        p_m = ref_forward(p_m, H0_np, vy_np, odor_np, "Mitral")
        p_g = ref_forward(p_g, W0_np, vx_np, ic_np, "Granule")

    assert out_m.shape == (cell_count, 1) and out_m.dtype == jnp.float32
    assert out_g.shape == (cell_count, 1) and out_g.dtype == jnp.float32
    assert np.allclose(np.asarray(out_m, dtype=np.float64), p_m, rtol=1e-5, atol=1e-6), (
        out_m, p_m)
    assert np.allclose(np.asarray(out_g, dtype=np.float64), p_g, rtol=1e-5, atol=1e-6), (
        out_g, p_g)

    print("KERNEL_OK")
</pallas_src>

<mosaic_0001>
module attributes {stable_mosaic.version = 11 : i64} {
  func.func @kernel(%arg0: memref<1x10xf32, #tpu.memory_space<vmem>>, %arg1: memref<10x10xf32, #tpu.memory_space<vmem>>, %arg2: memref<10x1xf32, #tpu.memory_space<vmem>>, %arg3: memref<1x10xf32, #tpu.memory_space<vmem>>, %arg4: memref<1x10xf32, #tpu.memory_space<vmem>>) attributes {dimension_semantics = [], scalar_prefetch = 0 : i64, scratch_operands = 0 : i64, tpu.core_type = #tpu.core_type<tc>} {
    %c0 = arith.constant 0 : index
    %c0_0 = arith.constant 0 : index
    %0 = vector.load %arg0[%c0, %c0_0] : memref<1x10xf32, #tpu.memory_space<vmem>>, vector<1x10xf32>
    %c0_1 = arith.constant 0 : index
    %c0_2 = arith.constant 0 : index
    %1 = vector.load %arg1[%c0_1, %c0_2] : memref<10x10xf32, #tpu.memory_space<vmem>>, vector<10x10xf32>
    %c0_3 = arith.constant 0 : index
    %c0_4 = arith.constant 0 : index
    %2 = vector.load %arg2[%c0_3, %c0_4] : memref<10x1xf32, #tpu.memory_space<vmem>>, vector<10x1xf32>
    %c0_5 = arith.constant 0 : index
    %c0_6 = arith.constant 0 : index
    %3 = vector.load %arg3[%c0_5, %c0_6] : memref<1x10xf32, #tpu.memory_space<vmem>>, vector<1x10xf32>
    %4 = vector.broadcast %2 : vector<10x1xf32> to vector<10x10xf32>
    %5 = arith.mulf %4, %1 : vector<10x10xf32>
    %cst = arith.constant dense<0.000000e+00> : vector<10xf32>
    %6 = vector.multi_reduction <add>, %5, %cst [0] : vector<10x10xf32> to vector<10xf32>
    %7 = vector.shape_cast %6 : vector<10xf32> to vector<1x10xf32>
    %cst_7 = arith.constant 0.714285731 : f32
    %8 = vector.broadcast %cst_7 : f32 to vector<1x10xf32>
    %9 = arith.mulf %8, %0 : vector<1x10xf32>
    %cst_8 = arith.constant -2.000000e+00 : f32
    %10 = vector.broadcast %cst_8 : f32 to vector<1x10xf32>
    %11 = arith.mulf %10, %7 : vector<1x10xf32>
    %12 = arith.addf %9, %11 : vector<1x10xf32>
    %cst_9 = arith.constant 2.000000e+00 : f32
    %13 = vector.broadcast %cst_9 : f32 to vector<1x10xf32>
    %14 = arith.mulf %13, %3 : vector<1x10xf32>
    %15 = arith.addf %12, %14 : vector<1x10xf32>
    %c0_10 = arith.constant 0 : index
    %c0_11 = arith.constant 0 : index
    %16 = vector.load %arg4[%c0_10, %c0_11] : memref<1x10xf32, #tpu.memory_space<vmem>>, vector<1x10xf32>
    tpu.vector_store %arg4[%c0_10, %c0_11], %15 {strides = array<i32>} : memref<1x10xf32, #tpu.memory_space<vmem>>, vector<1x10xf32>,
    return
  }
}

</mosaic_0001>

<llo_original>
// kernel: membrane_potential_step.1
$region0: #{membrane_potential_step.1}
  #allocation0 [shape = 'u32[]', space=smem, size = 0x4, offset = 0x4, fixed_abs, tag = 'smem constant byte address 0x4 - core index']
  #allocation1 [shape = 'u32[144,128]{1,0:T(1,128)}', space=vmem, size = 0x12000, scoped, tag = 'internal scratch']
  %s0 = inlined_call_operand.hbm [shape: f32[1,10], index: 0, kind: input, shape index: {}, may-alias: {0,4}]
  %s1 = inlined_call_operand.vmem [shape: f32[10,10], index: 1, kind: input, shape index: {}]
  %s2 = inlined_call_operand.vmem [shape: f32[10,1], index: 2, kind: input, shape index: {}]
  %s3 = inlined_call_operand.vmem [shape: f32[1,10], index: 3, kind: input, shape index: {}]
  %s4 = inlined_call_operand.hbm [shape: f32[1,10], index: 4, kind: output, shape index: {}, may-alias: {0,4}]
  %s5 = sld [smem:[#allocation0]]
  $region30: #{membrane_potential_step.1} parent=0
    _
  %s7 = ssub.s32 1, %s5
  %s8 = scalar_select 0, %s7, %s5
  $region1: #{membrane_potential_step.1} parent=0
    #allocation2 [shape = 'u8[512]{0}', space=vmem, size = 0x400, scoped, tag = 'input window, operand 0, single buffered']
    #allocation3 [shape = 's32[1]{0}', space=sflag, size = 0x4, scoped, tag = 'scoped memory for membrane_potential_step.1']
    #allocation4 [shape = 's32[1]{0}', space=sflag, size = 0x4, scoped, tag = 'scoped memory for membrane_potential_step.1']
    #allocation5 [shape = 'u8[512]{0}', space=vmem, size = 0x400, scoped, tag = 'output window, operand 0, single buffered']
    %9 = vsyncpa [#allocation3], 0
    %10 = vsyncpa [#allocation4], 0
    // Predicated region
    $region2: #{membrane_potential_step.1} parent=1 // pred_check
      _
    $region3: #{membrane_potential_step.1} parent=1 // pred_check_branch
      %12 = sbr.rel (0) target = $region5
    $region4: #{membrane_potential_step.1} parent=1 // pred_region
      %s14 = ssub.s32 16, 16
      %15 = vsyncadd [#allocation3], %s14
      %s17 = sshll.u32 [#allocation2], 4
      %s18 = int_to_ptr.vmem [resolvable:$true] %s17
      %20 = dma.hbm_to_vmem [thread:$0]  %s0, 16, %s18, [#allocation3]
    $region5: #{membrane_potential_step.1} parent=1 // pred_fallthru
      _
    // Predicated region
    $region6: #{membrane_potential_step.1} parent=1 // pred_check
      _
    $region7: #{membrane_potential_step.1} parent=1 // pred_check_branch
      %22 = sbr.rel (0) target = $region9
    $region8: #{membrane_potential_step.1} parent=1 // pred_region
      _
    $region9: #{membrane_potential_step.1} parent=1 // pred_fallthru
      _
    // Predicated region
    $region10: #{membrane_potential_step.1} parent=1 // pred_check
      _
    $region11: #{membrane_potential_step.1} parent=1 // pred_check_branch
      %24 = sbr.rel (0) target = $region13
    $region12: #{membrane_potential_step.1} parent=1 // pred_region
      _
    $region13: #{membrane_potential_step.1} parent=1 // pred_fallthru
      _
    // Predicated region
    $region14: #{membrane_potential_step.1} parent=1 // pred_check
      _
    $region15: #{membrane_potential_step.1} parent=1 // pred_check_branch
      %26 = sbr.rel (0) target = $region17
    $region16: #{membrane_potential_step.1} parent=1 // pred_region
      _
    $region17: #{membrane_potential_step.1} parent=1 // pred_fallthru
      _
    // Predicated region
    $region18: #{membrane_potential_step.1} parent=1 // pred_check
      _
    $region19: #{membrane_potential_step.1} parent=1 // pred_check_branch
      %28 = sbr.rel (0) target = $region21
    $region20: #{membrane_potential_step.1} parent=1 // pred_region
      %29 = dma.done [#allocation3], 16
    $region21: #{membrane_potential_step.1} parent=1 // pred_fallthru
      _
    %v30 = vld [vmem:[#allocation2] sm:$0x1]
    %v31 = vld [vmem:[%s1] sm:$0xff]
    %v32 = vld [vmem:[%s1 + $0x8] sm:$0x3]
    %v33 = vld [vmem:[%s2] sm:$0xff]
    %v34 = vld [vmem:[%s2 + $0x8] sm:$0x3]
    %v35 = vld [vmem:[%s3] sm:$0x1]
    %37 = vset.pattern.permute.xlu0 0
    %38 = vperm.xlu0 %37, %v33
    %v39 = vpop.permute.xlu0 %38
    %42 = vset.pattern.permute.xlu0 0
    %43 = vperm.xlu0 %42, %v34
    %v44 = vpop.permute.xlu0 %43
    %v46 = vmul.f32 %v39, %v31
    %v47 = vmul.f32 %v44, %v32
    %vm48 = vcmask 80896
    %v49 = vsel %vm48, %v46, 0.0
    %vm50 = vcmask 74752
    %v51 = vsel %vm50, %v47, 0.0
    %v52 = vadd.f32 %v49, %v51
    %v53 = vrot.slane %v52, 4
    %v54 = vadd.f32 %v52, %v53
    %v55 = vrot.slane %v54, 2
    %v56 = vadd.f32 %v54, %v55
    %v57 = vrot.slane %v56, 1
    %v58 = vadd.f32 %v56, %v57
    %v59 = vmul.f32 %v30, 0.71428573
    %v60 = vmul.f32 %v58, -2.0
    %v61 = vadd.f32 %v59, %v60
    %v62 = vmul.f32 %v35, 2.0
    %v63 = vadd.f32 %v61, %v62
    %vm64 = vcmask 73728
    %65 = vst.msk [vmem:[#allocation5] sm:$0x1] %vm64, %v63
    // Predicated region
    $region22: #{membrane_potential_step.1} parent=1 // pred_check
      _
    $region23: #{membrane_potential_step.1} parent=1 // pred_check_branch
      %67 = sbr.rel (0) target = $region25
    $region24: #{membrane_potential_step.1} parent=1 // pred_region
      %s69 = ssub.s32 16, 16
      %70 = vsyncadd [#allocation4], %s69
      %s72 = sshll.u32 [#allocation5], 4
      %s73 = int_to_ptr.vmem [resolvable:$true] %s72
      %75 = dma.vmem_to_hbm [thread:$0]  %s73, 16, %s4, [#allocation4]
    $region25: #{membrane_potential_step.1} parent=1 // pred_fallthru
      _
    // Predicated region
    $region26: #{membrane_potential_step.1} parent=1 // pred_check
      _
    $region27: #{membrane_potential_step.1} parent=1 // pred_check_branch
      %77 = sbr.rel (0) target = $region29
    $region28: #{membrane_potential_step.1} parent=1 // pred_region
      %78 = dma.done [#allocation4], 16
    $region29: #{membrane_potential_step.1} parent=1 // pred_fallthru
      _
    %79 = vsyncpa [#allocation3], 1
    %80 = vsyncpa [#allocation4], 1

</llo_original>
